<compile_context>
chip_gen: v7x
topology: tpu7x:2x2x1
jax: 0.10.0
libtpu: 0.0.40
codegen_flags: <defaults>
</compile_context>

<pallas_src>
import math

import jax
import jax.numpy as jnp
from jax.experimental import pallas as pl
from jax.experimental.pallas import tpu as pltpu


def _copy_kernel(x_ref, o_ref):
    # Pure pass-through tile copy (memory -> output).
    o_ref[...] = x_ref[...]


def _pick_tile_rows(rows, row_bytes, target_tile_bytes):
    """Largest multiple-of-8 divisor of `rows` whose tile stays <= target bytes."""
    cap = max(8, target_tile_bytes // max(row_bytes, 1))
    best = None
    for t in range(8, min(rows, cap) + 1, 8):
        if rows % t == 0:
            best = t
    # Fallback: whole array as a single block (block dims equal to the full
    # array dims always satisfy the (8,128) rule).
    return best if best is not None else rows


def pallas_identity_copy(memory, *, target_tile_bytes=2 * 1024 * 1024):
    """Explicit Pallas identity copy of `memory` (lane-dense, large row tiles)."""
    orig_shape = memory.shape
    dtype = memory.dtype
    total = math.prod(orig_shape) if orig_shape else 1
    itemsize = jnp.dtype(dtype).itemsize

    if total >= 128 and total % 128 == 0:
        lanes = 128
        rows = total // lanes
        flat = memory.reshape(rows, lanes)          # contiguous -> free relayout
        row_bytes = lanes * itemsize
        tile_rows = _pick_tile_rows(rows, row_bytes, target_tile_bytes)
        grid = (rows // tile_rows,)

        out = pl.pallas_call(
            _copy_kernel,
            out_shape=jax.ShapeDtypeStruct((rows, lanes), dtype),
            grid_spec=pltpu.PrefetchScalarGridSpec(
                num_scalar_prefetch=0,
                grid=grid,
                in_specs=[pl.BlockSpec((tile_rows, lanes), lambda i: (i, 0))],
                out_specs=pl.BlockSpec((tile_rows, lanes), lambda i: (i, 0)),
            ),
            compiler_params=pltpu.CompilerParams(
                dimension_semantics=("parallel",),
            ),
        )(flat)
        return out.reshape(orig_shape)

    # Rare ragged / tiny case: single full-array block (no grid).
    return pl.pallas_call(
        _copy_kernel,
        out_shape=jax.ShapeDtypeStruct(orig_shape, dtype),
    )(memory)


def dummy_decoder_forward(tgt, memory, tgt_mask=None, memory_mask=None,
                          tgt_key_padding_mask=None, memory_key_padding_mask=None,
                          materialize=False):
    """Pallas/JAX implementation of DummyDecoder.forward: returns `memory`.

    All other arguments are accepted (mirroring the PyTorch signature) and
    ignored, exactly as in the reference module.

    By default no data is moved at all (identity).  Set `materialize=True` to
    force an explicit Pallas copy kernel (op boundary / fresh buffer).
    """
    if not materialize:
        return memory
    return pallas_identity_copy(memory)


if __name__ == "__main__":
    # Small shapes consistent with a transformer decoder call:
    # seq=8, batch=2, d_model=32
    S, B, D = 8, 2, 32
    key = jax.random.PRNGKey(0)
    k_tgt, k_mem = jax.random.split(key)
    tgt = jax.random.normal(k_tgt, (S, B, D), dtype=jnp.float32)
    memory = jax.random.normal(k_mem, (S, B, D), dtype=jnp.float32)

    # Masks (ignored by DummyDecoder, constructed only to mirror the signature)
    tgt_mask = jnp.zeros((S, S), dtype=jnp.float32)
    memory_mask = None
    tgt_key_padding_mask = jnp.zeros((B, S), dtype=jnp.bool_)
    memory_key_padding_mask = None

    # Fast path: no copy at all (the module's true semantics / cost).
    out_fast = dummy_decoder_forward(tgt, memory, tgt_mask, memory_mask,
                                     tgt_key_padding_mask, memory_key_padding_mask)

    # Explicit Pallas kernel path (op boundary): optimized lane-dense copy.
    out_kernel = dummy_decoder_forward(tgt, memory, tgt_mask, memory_mask,
                                       tgt_key_padding_mask, memory_key_padding_mask,
                                       materialize=True)
    out_kernel = jax.block_until_ready(out_kernel)

    # Semantic check: both outputs must be exactly `memory`.
    assert out_fast.shape == memory.shape and out_fast.dtype == memory.dtype
    assert out_kernel.shape == memory.shape and out_kernel.dtype == memory.dtype
    assert bool(jnp.all(out_fast == memory))
    assert bool(jnp.all(out_kernel == memory))
    print("KERNEL_OK")
</pallas_src>

<mosaic_0001>
module attributes {stable_mosaic.version = 11 : i64} {
  func.func @_copy_kernel(%arg0: i32, %arg1: memref<4x128xf32, #tpu.memory_space<vmem>>, %arg2: memref<4x128xf32, #tpu.memory_space<vmem>>) attributes {dimension_semantics = [#tpu.dimension_semantics<parallel>], iteration_bounds = array<i64: 1>, scalar_prefetch = 0 : i64, scratch_operands = 0 : i64, tpu.core_type = #tpu.core_type<tc>, window_params = [{transform_indices = @transform_0, window_bounds = array<i64: 4, 128>}, {transform_indices = @transform_1, window_bounds = array<i64: 4, 128>}]} {
    %c0 = arith.constant 0 : index
    %c0_0 = arith.constant 0 : index
    %0 = vector.load %arg1[%c0, %c0_0] : memref<4x128xf32, #tpu.memory_space<vmem>>, vector<4x128xf32>
    %c0_1 = arith.constant 0 : index
    %c0_2 = arith.constant 0 : index
    %1 = vector.load %arg2[%c0_1, %c0_2] : memref<4x128xf32, #tpu.memory_space<vmem>>, vector<4x128xf32>
    tpu.vector_store %arg2[%c0_1, %c0_2], %0 {strides = array<i32>} : memref<4x128xf32, #tpu.memory_space<vmem>>, vector<4x128xf32>,
    return
  }
  func.func @transform_0(%arg0: i32) -> (i32, i32) {
    %c0_i32 = arith.constant 0 : i32
    %c0_i32_0 = arith.constant 0 : i32
    return %arg0, %c0_i32 : i32, i32
  }
  func.func @transform_1(%arg0: i32) -> (i32, i32) {
    %c0_i32 = arith.constant 0 : i32
    %c0_i32_0 = arith.constant 0 : i32
    return %arg0, %c0_i32 : i32, i32
  }
}

</mosaic_0001>

<llo_original>
// kernel: tpu_custom_call.1
$region0: #{tpu_custom_call.1}
  #allocation0 [shape = 'u32[]', space=smem, size = 0x4, offset = 0x4, fixed_abs, tag = 'smem constant byte address 0x4 - core index']
  #allocation1 [shape = 'u32[144,128]{1,0:T(1,128)}', space=vmem, size = 0x12000, scoped, tag = 'internal scratch']
  %s0 = inlined_call_operand.hbm [shape: f32[4,128], index: 0, kind: input, shape index: {}]
  %s1 = inlined_call_operand.hbm [shape: f32[4,128], index: 1, kind: output, shape index: {}]
  %s2 = sld [smem:[#allocation0]]
  $region18: #{tpu_custom_call.1} parent=0
    _
  %s4 = ssub.s32 1, %s2
  %s5 = scalar_select 0, %s4, %s2
  $region1: #{tpu_custom_call.1} parent=0
    #allocation2 [shape = 'u8[2048]{0}', space=vmem, size = 0x800, scoped, tag = 'input window, operand 0, single buffered']
    #allocation3 [shape = 's32[1]{0}', space=sflag, size = 0x4, scoped, tag = 'scoped memory for tpu_custom_call.1']
    #allocation4 [shape = 's32[1]{0}', space=sflag, size = 0x4, scoped, tag = 'scoped memory for tpu_custom_call.1']
    #allocation5 [shape = 'u8[2048]{0}', space=vmem, size = 0x800, scoped, tag = 'output window, operand 0, single buffered']
    %6 = vsyncpa [#allocation3], 0
    %7 = vsyncpa [#allocation4], 0
    // Predicated region
    $region2: #{tpu_custom_call.1} parent=1 // pred_check
      _
    $region3: #{tpu_custom_call.1} parent=1 // pred_check_branch
      %9 = sbr.rel (0) target = $region5
    $region4: #{tpu_custom_call.1} parent=1 // pred_region
      %s11 = ssub.s32 64, 64
      %12 = vsyncadd [#allocation3], %s11
      %s14 = sshll.u32 [#allocation2], 4
      %s15 = int_to_ptr.vmem [resolvable:$true] %s14
      %17 = dma.hbm_to_vmem [thread:$0]  %s0, 64, %s15, [#allocation3]
    $region5: #{tpu_custom_call.1} parent=1 // pred_fallthru
      _
    // Predicated region
    $region6: #{tpu_custom_call.1} parent=1 // pred_check
      _
    $region7: #{tpu_custom_call.1} parent=1 // pred_check_branch
      %19 = sbr.rel (0) target = $region9
    $region8: #{tpu_custom_call.1} parent=1 // pred_region
      %20 = dma.done [#allocation3], 64
    $region9: #{tpu_custom_call.1} parent=1 // pred_fallthru
      _
    %v21 = vld [vmem:[#allocation2] sm:$0xf]
    %22 = vst [vmem:[#allocation5] sm:$0xf] %v21
    // Predicated region
    $region10: #{tpu_custom_call.1} parent=1 // pred_check
      _
    $region11: #{tpu_custom_call.1} parent=1 // pred_check_branch
      %24 = sbr.rel (0) target = $region13
    $region12: #{tpu_custom_call.1} parent=1 // pred_region
      %s26 = ssub.s32 64, 64
      %27 = vsyncadd [#allocation4], %s26
      %s29 = sshll.u32 [#allocation5], 4
      %s30 = int_to_ptr.vmem [resolvable:$true] %s29
      %32 = dma.vmem_to_hbm [thread:$0]  %s30, 64, %s1, [#allocation4]
    $region13: #{tpu_custom_call.1} parent=1 // pred_fallthru
      _
    // Predicated region
    $region14: #{tpu_custom_call.1} parent=1 // pred_check
      _
    $region15: #{tpu_custom_call.1} parent=1 // pred_check_branch
      %34 = sbr.rel (0) target = $region17
    $region16: #{tpu_custom_call.1} parent=1 // pred_region
      %35 = dma.done [#allocation4], 64
    $region17: #{tpu_custom_call.1} parent=1 // pred_fallthru
      _
    %36 = vsyncpa [#allocation3], 1
    %37 = vsyncpa [#allocation4], 1

</llo_original>
